<compile_context>
chip_gen: v7x
topology: tpu7x:2x2x1
jax: 0.10.0
libtpu: 0.0.40
codegen_flags: <defaults>
</compile_context>

<pallas_src>
import functools

import jax
import jax.numpy as jnp
from jax.experimental import pallas as pl
from jax.experimental.pallas import tpu as pltpu


_ROW_ALIGN = 16  # bf16 sublane tile is (16, 128); keeps every slab slice aligned.


def _round_up(x, m):
    return (x + m - 1) // m * m


# ---------------------------------------------------------------------------
# Kernel
# ---------------------------------------------------------------------------
def _actor_critic_kernel(action_dim, action_range, state_ref, params_ref, out_ref):
    """Fused ActorCritic forward on one batch tile.

    params_ref layout (rows, L), bf16, every block zero-padded to L lanes and
    starting on a 16-row boundary:
      rows [0, Sp)           : w1      (S, H)
      rows [Sp, Sp+L)        : w2      (H, H)
      rows [Sp+L, Sp+2L)     : wa1|wc1 (H, 2H)   (actor/critic first layers fused)
      rows [Sp+2L, Sp+3L)    : w_out:  [0:H, 0:A] = wa2, [H:2H, A] = wc2
      rows [Sp+3L, Sp+3L+8)  : biases: row0 b1, row1 b2, row2 ba1|bc1,
                                        row3 [ba2 | bc2], rows 4..7 zero
    out_ref (TB, OUT_W) f32 : [ tanh(actor)*action_range (A lanes) | value | 0 ]
    """
    A = action_dim
    Sp = state_ref.shape[1]
    L = params_ref.shape[1]
    r_w2 = Sp
    r_wh = r_w2 + L
    r_wo = r_wh + L
    r_b = r_wo + L

    W = params_ref
    wt = W.dtype                           # bf16 (or f32) MXU operand dtype
    x = state_ref[...].astype(wt)          # (TB, Sp)

    # Shared trunk: Linear -> ReLU -> Linear -> ReLU (zero-padded lanes stay 0).
    h = jnp.dot(x, W[0:Sp, :], preferred_element_type=jnp.float32)
    h = jnp.maximum(h + W[r_b + 0:r_b + 1, :], 0.0)
    h = jnp.dot(h.astype(wt), W[r_w2:r_w2 + L, :],
                preferred_element_type=jnp.float32)
    h = jnp.maximum(h + W[r_b + 1:r_b + 2, :], 0.0)

    # Fused actor/critic first layers: lanes [0,H)=actor, [H,2H)=critic.
    g = jnp.dot(h.astype(wt), W[r_wh:r_wh + L, :],
                preferred_element_type=jnp.float32)
    g = jnp.maximum(g + W[r_b + 2:r_b + 3, :], 0.0)

    # Fused actor/critic second layers: lanes [0,A)=actor pre-tanh, lane A=value.
    o = jnp.dot(g.astype(wt), W[r_wo:r_wo + L, :],
                preferred_element_type=jnp.float32)
    o = o + W[r_b + 3:r_b + 4, :]

    lane = jax.lax.broadcasted_iota(jnp.int32, o.shape, 1)
    fused = jnp.where(lane < A, jnp.tanh(o) * action_range, o)
    out_ref[...] = fused[:, :out_ref.shape[1]].astype(out_ref.dtype)


# ---------------------------------------------------------------------------
# Parameter packing (done once, outside the kernel)
# ---------------------------------------------------------------------------
def pack_params(p, state_dim, action_dim, hidden_dim, dtype=jnp.bfloat16):
    """Packs all weights/biases into one lane-dense, row-aligned slab (rows, L)."""
    S, A, H = state_dim, action_dim, hidden_dim
    L = _round_up(max(2 * H, A + 1), 128)
    Sp = _round_up(S, _ROW_ALIGN)
    f32 = jnp.float32

    w1p = jnp.zeros((Sp, L), f32).at[:S, :H].set(p["w1"].astype(f32))
    w2p = jnp.zeros((L, L), f32).at[:H, :H].set(p["w2"].astype(f32))
    heads = jnp.concatenate([p["wa1"], p["wc1"]], axis=1).astype(f32)   # (H, 2H)
    whp = jnp.zeros((L, L), f32).at[:H, :2 * H].set(heads)
    wop = jnp.zeros((L, L), f32)
    wop = wop.at[:H, :A].set(p["wa2"].astype(f32))
    wop = wop.at[H:2 * H, A:A + 1].set(p["wc2"].astype(f32))

    bias = jnp.zeros((8, L), f32)
    bias = bias.at[0:1, :H].set(p["b1"].astype(f32))
    bias = bias.at[1:2, :H].set(p["b2"].astype(f32))
    bias = bias.at[2:3, :2 * H].set(
        jnp.concatenate([p["ba1"], p["bc1"]], axis=1).astype(f32))
    bias = bias.at[3:4, :A].set(p["ba2"].astype(f32))
    bias = bias.at[3:4, A:A + 1].set(p["bc2"].astype(f32))

    slab = jnp.concatenate([w1p, w2p, whp, wop, bias], axis=0)
    return slab.astype(dtype)


# ---------------------------------------------------------------------------
# Wrapper
# ---------------------------------------------------------------------------
def actor_critic_forward(state, packed_params, log_std, *, state_dim, action_dim,
                         hidden_dim, action_range=1.0, batch_tile=2048):
    """Runs the ActorCritic forward pass on TPU via Pallas.

    Returns (action_mean, action_log_std, state_value) matching the PyTorch
    module's forward().
    """
    B, S = state.shape
    assert S == state_dim
    A, H = action_dim, hidden_dim
    rows, L = packed_params.shape
    Sp = _round_up(S, _ROW_ALIGN)
    OUT_W = _round_up(A + 1, 8)
    assert rows == Sp + 3 * L + 8, "packed_params layout mismatch"
    assert L >= max(2 * H, A + 1)

    if Sp != S:
        state = jnp.pad(state, ((0, 0), (0, Sp - S)))

    # Batch tile: big enough to amortize the ~0.35 us per-grid-step overhead,
    # small enough that the double-buffered IO tiles + intermediates stay well
    # inside every generation's default scoped VMEM (16 MiB on v5e).
    batch_tile = max(8, _round_up(batch_tile, 8))
    TB = min(_round_up(B, 8), batch_tile)
    Bp = _round_up(B, TB)
    # v7x megacore: never let a large batch collapse into one grid step — the
    # "parallel" batch axis is how work is sharded across its 2 TensorCores.
    if Bp // TB == 1 and B >= 1024:
        TB = _round_up(pl.cdiv(B, 2), 8)
        Bp = _round_up(B, TB)
    if Bp != B:
        state = jnp.pad(state, ((0, Bp - B), (0, 0)))
    grid = (Bp // TB,)

    kernel = functools.partial(_actor_critic_kernel, A, float(action_range))

    def run(single_buffer_weights):
        if single_buffer_weights:
            # Constant index_map: the slab never changes, one buffer is enough.
            w_spec = pl.BlockSpec((rows, L), lambda i: (0, 0),
                                  pipeline_mode=pl.Buffered(1))
        else:
            w_spec = pl.BlockSpec((rows, L), lambda i: (0, 0))
        return pl.pallas_call(
            kernel,
            out_shape=jax.ShapeDtypeStruct((Bp, OUT_W), jnp.float32),
            grid=grid,
            in_specs=[
                pl.BlockSpec((TB, Sp), lambda i: (i, 0)),   # state: tiled over batch
                w_spec,                                     # weights: VMEM-resident
            ],
            out_specs=pl.BlockSpec((TB, OUT_W), lambda i: (i, 0)),
            compiler_params=pltpu.CompilerParams(
                dimension_semantics=("parallel",)),
        )(state, packed_params)

    try:
        out = run(single_buffer_weights=True)
    except Exception:
        # Pallas versions that reject Buffered(1): fall back to default buffering.
        out = run(single_buffer_weights=False)

    mean = out[:B, :A]
    value = out[:B, A:A + 1]
    # log_std is a constant broadcast: done in plain JAX (no kernel cost).
    log_std_b = jnp.broadcast_to(log_std.reshape(1, A), (B, A))
    return mean, log_std_b, value


# ---------------------------------------------------------------------------
# Parameter init + references (for verification)
# ---------------------------------------------------------------------------
def _xavier_uniform(key, fan_in, fan_out):
    bound = (6.0 / (fan_in + fan_out)) ** 0.5
    return jax.random.uniform(
        key, (fan_in, fan_out), jnp.float32, minval=-bound, maxval=bound)


def init_params(key, state_dim, action_dim, hidden_dim, std_init=0.5):
    """Matches the PyTorch module: xavier_uniform weights, zero biases,
    log_std = log(std_init). Weights stored as (in, out)."""
    keys = jax.random.split(key, 6)
    return {
        "w1": _xavier_uniform(keys[0], state_dim, hidden_dim),
        "b1": jnp.zeros((1, hidden_dim), jnp.float32),
        "w2": _xavier_uniform(keys[1], hidden_dim, hidden_dim),
        "b2": jnp.zeros((1, hidden_dim), jnp.float32),
        "wa1": _xavier_uniform(keys[2], hidden_dim, hidden_dim),
        "ba1": jnp.zeros((1, hidden_dim), jnp.float32),
        "wa2": _xavier_uniform(keys[3], hidden_dim, action_dim),
        "ba2": jnp.zeros((1, action_dim), jnp.float32),
        "wc1": _xavier_uniform(keys[4], hidden_dim, hidden_dim),
        "bc1": jnp.zeros((1, hidden_dim), jnp.float32),
        "wc2": _xavier_uniform(keys[5], hidden_dim, 1),
        "bc2": jnp.zeros((1, 1), jnp.float32),
        "log_std": jnp.full((1, action_dim), jnp.log(std_init), jnp.float32),
    }


def reference_forward(state, p, action_range=1.0):
    """Pure f32 reference (PyTorch-module semantics)."""
    h = jax.nn.relu(state @ p["w1"] + p["b1"])
    h = jax.nn.relu(h @ p["w2"] + p["b2"])
    a = jax.nn.relu(h @ p["wa1"] + p["ba1"])
    mean = jnp.tanh(a @ p["wa2"] + p["ba2"]) * action_range
    log_std = jnp.broadcast_to(p["log_std"], mean.shape)
    c = jax.nn.relu(h @ p["wc1"] + p["bc1"])
    value = c @ p["wc2"] + p["bc2"]
    return mean, log_std, value


def reference_forward_mixed(state, p, action_range=1.0):
    """Mirrors the kernel's bf16-weight / bf16-activation, f32-accumulate math."""
    bf = jnp.bfloat16

    def mm(a, w):
        return jnp.dot(a.astype(bf), w.astype(bf),
                       preferred_element_type=jnp.float32)

    def b(v):
        return v.astype(bf)

    h = jax.nn.relu(mm(state, p["w1"]) + b(p["b1"]))
    h = jax.nn.relu(mm(h, p["w2"]) + b(p["b2"]))
    a = jax.nn.relu(mm(h, p["wa1"]) + b(p["ba1"]))
    mean = jnp.tanh(mm(a, p["wa2"]) + b(p["ba2"])) * action_range
    c = jax.nn.relu(mm(h, p["wc1"]) + b(p["bc1"]))
    value = mm(c, p["wc2"]) + b(p["bc2"])
    log_std = jnp.broadcast_to(p["log_std"], mean.shape)
    return mean, log_std, value


if __name__ == "__main__":
    batch = 64
    state_dim = 16
    action_dim = 8
    hidden_dim = 32
    action_range = 1.0

    key = jax.random.PRNGKey(0)
    k_state, k_params = jax.random.split(key)

    state = jax.random.normal(k_state, (batch, state_dim), jnp.float32)
    params = init_params(k_params, state_dim, action_dim, hidden_dim, std_init=0.5)
    packed = pack_params(params, state_dim, action_dim, hidden_dim)

    ref_mean, ref_log_std, ref_value = reference_forward(state, params, action_range)
    mix_mean, _, mix_value = reference_forward_mixed(state, params, action_range)

    # Run once with the default tile (single grid step at this tiny batch) and
    # once with batch_tile=32 so the multi-step "parallel" batch grid is exercised.
    for tile in (None, 32):
        kwargs = dict(state_dim=state_dim, action_dim=action_dim,
                      hidden_dim=hidden_dim, action_range=action_range)
        if tile is not None:
            kwargs["batch_tile"] = tile
        mean, log_std, value = actor_critic_forward(
            state, packed, params["log_std"], **kwargs)
        jax.block_until_ready((mean, log_std, value))

        assert mean.shape == (batch, action_dim)
        assert log_std.shape == (batch, action_dim)
        assert value.shape == (batch, 1)
        # Tight check against a reference that mirrors the kernel's bf16 numerics.
        assert jnp.allclose(mean, mix_mean, atol=2e-3), \
            float(jnp.max(jnp.abs(mean - mix_mean)))
        assert jnp.allclose(value, mix_value, atol=2e-3), \
            float(jnp.max(jnp.abs(value - mix_value)))
        # Loose check against the pure-f32 reference (bf16 weight rounding only).
        assert jnp.allclose(mean, ref_mean, atol=5e-2), \
            float(jnp.max(jnp.abs(mean - ref_mean)))
        assert jnp.allclose(value, ref_value, atol=5e-2), \
            float(jnp.max(jnp.abs(value - ref_value)))
        assert jnp.allclose(log_std, ref_log_std, atol=1e-6)

    print("KERNEL_OK")
</pallas_src>

<mosaic_0001>
module attributes {stable_mosaic.version = 11 : i64} {
  func.func @_actor_critic_kernel(%arg0: i32, %arg1: memref<64x16xf32, #tpu.memory_space<vmem>>, %arg2: memref<408x128xbf16, #tpu.memory_space<vmem>>, %arg3: memref<64x16xf32, #tpu.memory_space<vmem>>) attributes {dimension_semantics = [#tpu.dimension_semantics<parallel>], iteration_bounds = array<i64: 1>, scalar_prefetch = 0 : i64, scratch_operands = 0 : i64, tpu.core_type = #tpu.core_type<tc>, window_params = [{transform_indices = @transform_0, window_bounds = array<i64: 64, 16>}, {pipeline_mode = #tpu.pipeline_mode<synchronous>, transform_indices = @transform_1, window_bounds = array<i64: 408, 128>}, {transform_indices = @transform_2, window_bounds = array<i64: 64, 16>}]} {
    %c0 = arith.constant 0 : index
    %c0_0 = arith.constant 0 : index
    %0 = vector.load %arg1[%c0, %c0_0] : memref<64x16xf32, #tpu.memory_space<vmem>>, vector<64x16xf32>
    %1 = arith.truncf %0 : vector<64x16xf32> to vector<64x16xbf16>
    %c0_1 = arith.constant 0 : index
    %c0_2 = arith.constant 0 : index
    %2 = vector.load %arg2[%c0_1, %c0_2] : memref<408x128xbf16, #tpu.memory_space<vmem>>, vector<16x128xbf16>
    %cst = arith.constant dense<0.000000e+00> : vector<64x128xf32>
    %3 = tpu.matmul %1, %2, %cst {dimension_numbers = #tpu.dot_dimension_numbers<[1], [0], [0], [1], [0, 0, 1, 1], [], []>} : vector<64x16xbf16>, vector<16x128xbf16>, vector<64x128xf32> -> vector<64x128xf32>
    %c400 = arith.constant 400 : index
    %c0_3 = arith.constant 0 : index
    %4 = vector.load %arg2[%c400, %c0_3] : memref<408x128xbf16, #tpu.memory_space<vmem>>, vector<1x128xbf16>
    %5 = arith.extf %4 : vector<1x128xbf16> to vector<1x128xf32>
    %6 = vector.broadcast %5 : vector<1x128xf32> to vector<64x128xf32>
    %7 = arith.addf %3, %6 : vector<64x128xf32>
    %cst_4 = arith.constant 0.000000e+00 : f32
    %8 = vector.broadcast %cst_4 : f32 to vector<64x128xf32>
    %9 = arith.maximumf %7, %8 : vector<64x128xf32>
    %10 = arith.truncf %9 : vector<64x128xf32> to vector<64x128xbf16>
    %c16 = arith.constant 16 : index
    %c0_5 = arith.constant 0 : index
    %11 = vector.load %arg2[%c16, %c0_5] : memref<408x128xbf16, #tpu.memory_space<vmem>>, vector<128x128xbf16>
    %cst_6 = arith.constant dense<0.000000e+00> : vector<64x128xf32>
    %12 = tpu.matmul %10, %11, %cst_6 {dimension_numbers = #tpu.dot_dimension_numbers<[1], [0], [0], [1], [0, 0, 1, 1], [], []>} : vector<64x128xbf16>, vector<128x128xbf16>, vector<64x128xf32> -> vector<64x128xf32>
    %c401 = arith.constant 401 : index
    %c0_7 = arith.constant 0 : index
    %13 = vector.load %arg2[%c401, %c0_7] : memref<408x128xbf16, #tpu.memory_space<vmem>>, vector<1x128xbf16>
    %14 = arith.extf %13 : vector<1x128xbf16> to vector<1x128xf32>
    %15 = vector.broadcast %14 : vector<1x128xf32> to vector<64x128xf32>
    %16 = arith.addf %12, %15 : vector<64x128xf32>
    %cst_8 = arith.constant 0.000000e+00 : f32
    %17 = vector.broadcast %cst_8 : f32 to vector<64x128xf32>
    %18 = arith.maximumf %16, %17 : vector<64x128xf32>
    %19 = arith.truncf %18 : vector<64x128xf32> to vector<64x128xbf16>
    %c144 = arith.constant 144 : index
    %c0_9 = arith.constant 0 : index
    %20 = vector.load %arg2[%c144, %c0_9] : memref<408x128xbf16, #tpu.memory_space<vmem>>, vector<128x128xbf16>
    %cst_10 = arith.constant dense<0.000000e+00> : vector<64x128xf32>
    %21 = tpu.matmul %19, %20, %cst_10 {dimension_numbers = #tpu.dot_dimension_numbers<[1], [0], [0], [1], [0, 0, 1, 1], [], []>} : vector<64x128xbf16>, vector<128x128xbf16>, vector<64x128xf32> -> vector<64x128xf32>
    %c402 = arith.constant 402 : index
    %c0_11 = arith.constant 0 : index
    %22 = vector.load %arg2[%c402, %c0_11] : memref<408x128xbf16, #tpu.memory_space<vmem>>, vector<1x128xbf16>
    %23 = arith.extf %22 : vector<1x128xbf16> to vector<1x128xf32>
    %24 = vector.broadcast %23 : vector<1x128xf32> to vector<64x128xf32>
    %25 = arith.addf %21, %24 : vector<64x128xf32>
    %cst_12 = arith.constant 0.000000e+00 : f32
    %26 = vector.broadcast %cst_12 : f32 to vector<64x128xf32>
    %27 = arith.maximumf %25, %26 : vector<64x128xf32>
    %28 = arith.truncf %27 : vector<64x128xf32> to vector<64x128xbf16>
    %c272 = arith.constant 272 : index
    %c0_13 = arith.constant 0 : index
    %29 = vector.load %arg2[%c272, %c0_13] : memref<408x128xbf16, #tpu.memory_space<vmem>>, vector<128x128xbf16>
    %cst_14 = arith.constant dense<0.000000e+00> : vector<64x128xf32>
    %30 = tpu.matmul %28, %29, %cst_14 {dimension_numbers = #tpu.dot_dimension_numbers<[1], [0], [0], [1], [0, 0, 1, 1], [], []>} : vector<64x128xbf16>, vector<128x128xbf16>, vector<64x128xf32> -> vector<64x128xf32>
    %c403 = arith.constant 403 : index
    %c0_15 = arith.constant 0 : index
    %31 = vector.load %arg2[%c403, %c0_15] : memref<408x128xbf16, #tpu.memory_space<vmem>>, vector<1x128xbf16>
    %32 = arith.extf %31 : vector<1x128xbf16> to vector<1x128xf32>
    %33 = vector.broadcast %32 : vector<1x128xf32> to vector<64x128xf32>
    %34 = arith.addf %30, %33 : vector<64x128xf32>
    %35 = tpu.iota {dimensions = array<i32: 1>} : vector<64x128xi32>
    %c8_i32 = arith.constant 8 : i32
    %36 = vector.broadcast %c8_i32 : i32 to vector<64x128xi32>
    %37 = arith.cmpi slt, %35, %36 : vector<64x128xi32>
    %38 = math.tanh %34 : vector<64x128xf32>
    %cst_16 = arith.constant 1.000000e+00 : f32
    %39 = vector.broadcast %cst_16 : f32 to vector<64x128xf32>
    %40 = arith.mulf %38, %39 : vector<64x128xf32>
    %41 = arith.select %37, %40, %34 : vector<64x128xi1>, vector<64x128xf32>
    %42 = vector.extract_strided_slice %41 {offsets = [0, 0], sizes = [64, 16], strides = [1, 1]} : vector<64x128xf32> to vector<64x16xf32>
    %c0_17 = arith.constant 0 : index
    %c0_18 = arith.constant 0 : index
    %43 = vector.load %arg3[%c0_17, %c0_18] : memref<64x16xf32, #tpu.memory_space<vmem>>, vector<64x16xf32>
    tpu.vector_store %arg3[%c0_17, %c0_18], %42 {strides = array<i32>} : memref<64x16xf32, #tpu.memory_space<vmem>>, vector<64x16xf32>,
    return
  }
  func.func @transform_0(%arg0: i32) -> (i32, i32) {
    %c0_i32 = arith.constant 0 : i32
    %c0_i32_0 = arith.constant 0 : i32
    return %arg0, %c0_i32 : i32, i32
  }
  func.func @transform_1(%arg0: i32) -> (i32, i32) {
    %c0_i32 = arith.constant 0 : i32
    %c0_i32_0 = arith.constant 0 : i32
    %c0_i32_1 = arith.constant 0 : i32
    return %c0_i32, %c0_i32_0 : i32, i32
  }
  func.func @transform_2(%arg0: i32) -> (i32, i32) {
    %c0_i32 = arith.constant 0 : i32
    %c0_i32_0 = arith.constant 0 : i32
    return %arg0, %c0_i32 : i32, i32
  }
}

module attributes {stable_mosaic.version = 11 : i64} {
  func.func @_actor_critic_kernel(%arg0: i32, %arg1: memref<64x16xf32, #tpu.memory_space<vmem>>, %arg2: memref<408x128xbf16, #tpu.memory_space<vmem>>, %arg3: memref<64x16xf32, #tpu.memory_space<vmem>>) attributes {dimension_semantics = [#tpu.dimension_semantics<parallel>], iteration_bounds = array<i64: 1>, scalar_prefetch = 0 : i64, scratch_operands = 0 : i64, tpu.core_type = #tpu.core_type<tc>, window_params = [{transform_indices = @transform_0, window_bounds = array<i64: 64, 16>}, {pipeline_mode = #tpu.pipeline_mode<synchronous>, transform_indices = @transform_1, window_bounds = array<i64: 408, 128>}, {transform_indices = @transform_2, window_bounds = array<i64: 64, 16>}]} {
    %c0 = arith.constant 0 : index
    %c0_0 = arith.constant 0 : index
    %0 = vector.load %arg1[%c0, %c0_0] : memref<64x16xf32, #tpu.memory_space<vmem>>, vector<64x16xf32>
    %1 = arith.truncf %0 : vector<64x16xf32> to vector<64x16xbf16>
    %c0_1 = arith.constant 0 : index
    %c0_2 = arith.constant 0 : index
    %2 = vector.load %arg2[%c0_1, %c0_2] : memref<408x128xbf16, #tpu.memory_space<vmem>>, vector<16x128xbf16>
    %cst = arith.constant dense<0.000000e+00> : vector<64x128xf32>
    %3 = tpu.matmul %1, %2, %cst {dimension_numbers = #tpu.dot_dimension_numbers<[1], [0], [0], [1], [0, 0, 1, 1], [], []>} : vector<64x16xbf16>, vector<16x128xbf16>, vector<64x128xf32> -> vector<64x128xf32>
    %c400 = arith.constant 400 : index
    %c0_3 = arith.constant 0 : index
    %4 = vector.load %arg2[%c400, %c0_3] : memref<408x128xbf16, #tpu.memory_space<vmem>>, vector<1x128xbf16>
    %5 = arith.extf %4 : vector<1x128xbf16> to vector<1x128xf32>
    %6 = vector.broadcast %5 : vector<1x128xf32> to vector<64x128xf32>
    %7 = arith.addf %3, %6 : vector<64x128xf32>
    %cst_4 = arith.constant 0.000000e+00 : f32
    %8 = vector.broadcast %cst_4 : f32 to vector<64x128xf32>
    %9 = arith.maximumf %7, %8 : vector<64x128xf32>
    %10 = arith.truncf %9 : vector<64x128xf32> to vector<64x128xbf16>
    %c16 = arith.constant 16 : index
    %c0_5 = arith.constant 0 : index
    %11 = vector.load %arg2[%c16, %c0_5] : memref<408x128xbf16, #tpu.memory_space<vmem>>, vector<128x128xbf16>
    %cst_6 = arith.constant dense<0.000000e+00> : vector<64x128xf32>
    %12 = tpu.matmul %10, %11, %cst_6 {dimension_numbers = #tpu.dot_dimension_numbers<[1], [0], [0], [1], [0, 0, 1, 1], [], []>} : vector<64x128xbf16>, vector<128x128xbf16>, vector<64x128xf32> -> vector<64x128xf32>
    %c401 = arith.constant 401 : index
    %c0_7 = arith.constant 0 : index
    %13 = vector.load %arg2[%c401, %c0_7] : memref<408x128xbf16, #tpu.memory_space<vmem>>, vector<1x128xbf16>
    %14 = arith.extf %13 : vector<1x128xbf16> to vector<1x128xf32>
    %15 = vector.broadcast %14 : vector<1x128xf32> to vector<64x128xf32>
    %16 = arith.addf %12, %15 : vector<64x128xf32>
    %cst_8 = arith.constant 0.000000e+00 : f32
    %17 = vector.broadcast %cst_8 : f32 to vector<64x128xf32>
    %18 = arith.maximumf %16, %17 : vector<64x128xf32>
    %19 = arith.truncf %18 : vector<64x128xf32> to vector<64x128xbf16>
    %c144 = arith.constant 144 : index
    %c0_9 = arith.constant 0 : index
    %20 = vector.load %arg2[%c144, %c0_9] : memref<408x128xbf16, #tpu.memory_space<vmem>>, vector<128x128xbf16>
    %cst_10 = arith.constant dense<0.000000e+00> : vector<64x128xf32>
    %21 = tpu.matmul %19, %20, %cst_10 {dimension_numbers = #tpu.dot_dimension_numbers<[1], [0], [0], [1], [0, 0, 1, 1], [], []>} : vector<64x128xbf16>, vector<128x128xbf16>, vector<64x128xf32> -> vector<64x128xf32>
    %c402 = arith.constant 402 : index
    %c0_11 = arith.constant 0 : index
    %22 = vector.load %arg2[%c402, %c0_11] : memref<408x128xbf16, #tpu.memory_space<vmem>>, vector<1x128xbf16>
    %23 = arith.extf %22 : vector<1x128xbf16> to vector<1x128xf32>
    %24 = vector.broadcast %23 : vector<1x128xf32> to vector<64x128xf32>
    %25 = arith.addf %21, %24 : vector<64x128xf32>
    %cst_12 = arith.constant 0.000000e+00 : f32
    %26 = vector.broadcast %cst_12 : f32 to vector<64x128xf32>
    %27 = arith.maximumf %25, %26 : vector<64x128xf32>
    %28 = arith.truncf %27 : vector<64x128xf32> to vector<64x128xbf16>
    %c272 = arith.constant 272 : index
    %c0_13 = arith.constant 0 : index
    %29 = vector.load %arg2[%c272, %c0_13] : memref<408x128xbf16, #tpu.memory_space<vmem>>, vector<128x128xbf16>
    %cst_14 = arith.constant dense<0.000000e+00> : vector<64x128xf32>
    %30 = tpu.matmul %28, %29, %cst_14 {dimension_numbers = #tpu.dot_dimension_numbers<[1], [0], [0], [1], [0, 0, 1, 1], [], []>} : vector<64x128xbf16>, vector<128x128xbf16>, vector<64x128xf32> -> vector<64x128xf32>
    %c403 = arith.constant 403 : index
    %c0_15 = arith.constant 0 : index
    %31 = vector.load %arg2[%c403, %c0_15] : memref<408x128xbf16, #tpu.memory_space<vmem>>, vector<1x128xbf16>
    %32 = arith.extf %31 : vector<1x128xbf16> to vector<1x128xf32>
    %33 = vector.broadcast %32 : vector<1x128xf32> to vector<64x128xf32>
    %34 = arith.addf %30, %33 : vector<64x128xf32>
    %35 = tpu.iota {dimensions = array<i32: 1>} : vector<64x128xi32>
    %c8_i32 = arith.constant 8 : i32
    %36 = vector.broadcast %c8_i32 : i32 to vector<64x128xi32>
    %37 = arith.cmpi slt, %35, %36 : vector<64x128xi32>
    %38 = math.tanh %34 : vector<64x128xf32>
    %cst_16 = arith.constant 1.000000e+00 : f32
    %39 = vector.broadcast %cst_16 : f32 to vector<64x128xf32>
    %40 = arith.mulf %38, %39 : vector<64x128xf32>
    %41 = arith.select %37, %40, %34 : vector<64x128xi1>, vector<64x128xf32>
    %42 = vector.extract_strided_slice %41 {offsets = [0, 0], sizes = [64, 16], strides = [1, 1]} : vector<64x128xf32> to vector<64x16xf32>
    %c0_17 = arith.constant 0 : index
    %c0_18 = arith.constant 0 : index
    %43 = vector.load %arg3[%c0_17, %c0_18] : memref<64x16xf32, #tpu.memory_space<vmem>>, vector<64x16xf32>
    tpu.vector_store %arg3[%c0_17, %c0_18], %42 {strides = array<i32>} : memref<64x16xf32, #tpu.memory_space<vmem>>, vector<64x16xf32>,
    return
  }
  func.func @transform_0(%arg0: i32) -> (i32, i32) {
    %c0_i32 = arith.constant 0 : i32
    %c0_i32_0 = arith.constant 0 : i32
    return %arg0, %c0_i32 : i32, i32
  }
  func.func @transform_1(%arg0: i32) -> (i32, i32) {
    %c0_i32 = arith.constant 0 : i32
    %c0_i32_0 = arith.constant 0 : i32
    %c0_i32_1 = arith.constant 0 : i32
    return %c0_i32, %c0_i32_0 : i32, i32
  }
  func.func @transform_2(%arg0: i32) -> (i32, i32) {
    %c0_i32 = arith.constant 0 : i32
    %c0_i32_0 = arith.constant 0 : i32
    return %arg0, %c0_i32 : i32, i32
  }
}

</mosaic_0001>

<llo_original>
// kernel: tpu_custom_call.1
$region0: #{tpu_custom_call.1}
  #allocation0 [shape = 'u32[]', space=smem, size = 0x4, offset = 0x4, fixed_abs, tag = 'smem constant byte address 0x4 - core index']
  #allocation1 [shape = 'u32[144,128]{1,0:T(1,128)}', space=vmem, size = 0x12000, scoped, tag = 'internal scratch']
  %s0 = inlined_call_operand.vmem [shape: f32[64,16], index: 0, kind: input, shape index: {}]
  %s1 = inlined_call_operand.hbm [shape: bf16[408,128], index: 1, kind: input, shape index: {}]
  %s2 = inlined_call_operand.vmem [shape: f32[64,16], index: 2, kind: output, shape index: {}]
  %s3 = sld [smem:[#allocation0]]
  $region22: #{tpu_custom_call.1} parent=0
    _
  %s5 = ssub.s32 1, %s3
  %s6 = scalar_select 0, %s5, %s3
  $region1: #{tpu_custom_call.1} parent=0
    #allocation2 [shape = 'u8[104448]{0}', space=vmem, size = 0x19800, scoped, tag = 'input window, operand 1, single buffered']
    #allocation3 [shape = 's32[1]{0}', space=sflag, size = 0x4, scoped, tag = 'scoped memory for tpu_custom_call.1']
    %7 = vsyncpa [#allocation3], 0
    // Predicated region
    $region2: #{tpu_custom_call.1} parent=1 // pred_check
      _
    $region3: #{tpu_custom_call.1} parent=1 // pred_check_branch
      %9 = sbr.rel (0) target = $region5
    $region4: #{tpu_custom_call.1} parent=1 // pred_region
      _
    $region5: #{tpu_custom_call.1} parent=1 // pred_fallthru
      _
    // Predicated region
    $region6: #{tpu_custom_call.1} parent=1 // pred_check
      _
    $region7: #{tpu_custom_call.1} parent=1 // pred_check_branch
      %11 = sbr.rel (0) target = $region9
    $region8: #{tpu_custom_call.1} parent=1 // pred_region
      %s13 = ssub.s32 3264, 3264
      %14 = vsyncadd [#allocation3], %s13
      %s15 = sshll.u32 [#allocation2], 4
      %s16 = int_to_ptr.vmem [resolvable:$true] %s15
      %21 = dma.hbm_to_vmem [thread:$0]  %s1, 3264, %s16, [#allocation3], 64, 64, 4
    $region9: #{tpu_custom_call.1} parent=1 // pred_fallthru
      _
    // Predicated region
    $region10: #{tpu_custom_call.1} parent=1 // pred_check
      _
    $region11: #{tpu_custom_call.1} parent=1 // pred_check_branch
      %23 = sbr.rel (0) target = $region13
    $region12: #{tpu_custom_call.1} parent=1 // pred_region
      %24 = dma.done [#allocation3], 3264
    $region13: #{tpu_custom_call.1} parent=1 // pred_fallthru
      _
    %v26 = vld [vmem:[%s0] sm:$0xff]
    %v27 = vld [vmem:[%s0 + $0x8] sm:$0xff]
    %v28 = vld [vmem:[%s0 + $0x10] sm:$0xff]
    %v29 = vld [vmem:[%s0 + $0x18] sm:$0xff]
    %v30 = vld [vmem:[%s0 + $0x20] sm:$0xff]
    %v31 = vld [vmem:[%s0 + $0x28] sm:$0xff]
    %v32 = vld [vmem:[%s0 + $0x30] sm:$0xff]
    %v33 = vld [vmem:[%s0 + $0x38] sm:$0xff]
    %v34 = vpack.c.bf16 %v27, %v26
    %v35 = vpack.c.bf16 %v29, %v28
    %v36 = vpack.c.bf16 %v31, %v30
    %v37 = vpack.c.bf16 %v33, %v32
    %v38 = vld [vmem:[#allocation2] sm:$0xf]
    %v39 = vld [vmem:[#allocation2 + $0x4] sm:$0xf]
    %v40 = vld [vmem:[#allocation2 + $0xc8] sm:$0x1]
    %v41 = vunpack.c.l.bf16 %v40
    %v42 = vlaneseq
    %v43 = vshrl.u32 %v42, 7
    %v44 = vsub.s32 0, %v43
    %v45 = vrot.slane %v41, %v44
    %v48 = vunpack.c.l.b16 %v38
    %v49 = vunpack.c.l.b16 %v39
    %v50 = vpack.c.b16 %v49, %v48
    %vm52 = vcmask 130048
    %v54 = vsel %vm52, %v34, 0
    %v57 = vsel %vm52, %v35, 0
    %v60 = vsel %vm52, %v36, 0
    %v63 = vsel %vm52, %v37, 0
    %65 = vmatprep.subr.bf16.mxu0 0
    %66 = vmatpush1.bf16.msra.mxu0 %v50
    %67 = vmatprep.subr.bf16.mxu0 0
    %68 = vmatpush1.bf16.msra.mxu0 0
    %69 = vmatprep.subr.bf16.mxu0 0
    %70 = vmatpush1.bf16.msra.mxu0 0
    %71 = vmatprep.subr.bf16.mxu0 0
    %72 = vmatpush1.bf16.msra.mxu0 0
    %73 = vmatprep.subr.bf16.mxu0 0
    %74 = vmatpush1.bf16.msra.mxu0 0
    %75 = vmatprep.subr.bf16.mxu0 0
    %76 = vmatpush1.bf16.msra.mxu0 0
    %77 = vmatprep.subr.bf16.mxu0 0
    %78 = vmatpush1.bf16.msra.mxu0 0
    %79 = vmatprep.subr.bf16.mxu0 0
    %80 = vmatpush1.bf16.msra.mxu0 0
    %81 = vmatprep.subr.bf16.mxu0 0
    %82 = vmatpush1.bf16.msra.mxu0 0
    %83 = vmatprep.subr.bf16.mxu0 0
    %84 = vmatpush1.bf16.msra.mxu0 0
    %85 = vmatprep.subr.bf16.mxu0 0
    %86 = vmatpush1.bf16.msra.mxu0 0
    %87 = vmatprep.subr.bf16.mxu0 0
    %88 = vmatpush1.bf16.msra.mxu0 0
    %89 = vmatprep.subr.bf16.mxu0 0
    %90 = vmatpush1.bf16.msra.mxu0 0
    %91 = vmatprep.subr.bf16.mxu0 0
    %92 = vmatpush1.bf16.msra.mxu0 0
    %93 = vmatprep.subr.bf16.mxu0 0
    %94 = vmatpush1.bf16.msra.mxu0 0
    %95 = vmatprep.subr.bf16.mxu0 0
    %96 = vmatpush1.bf16.msra.mxu0 0
    %97 = vmatprep.mubr.bf16.mxu0 0
    %98 = vmatmul.mubr.bf16.gmra.mrb[0].mxu0 %v54
    %v99 = vpop.f32.mrb[0].mxu0
    %v100 = vadd.f32 %v45, %v99
    %v101 = vpop.f32.mrb[0].mxu0
    %v102 = vpop.f32.mrb[0].mxu0
    %v103 = vadd.f32 %v45, %v102
    %v104 = vpop.f32.mrb[0].mxu0
    %105 = vmatprep.mubr.bf16.mxu0 0
    %106 = vmatmul.mubr.bf16.gmra.mrb[0].mxu0 %v57
    %v107 = vpop.f32.mrb[0].mxu0
    %v108 = vadd.f32 %v45, %v107
    %v109 = vpop.f32.mrb[0].mxu0
    %v110 = vpop.f32.mrb[0].mxu0
    %v111 = vadd.f32 %v45, %v110
    %v112 = vpop.f32.mrb[0].mxu0
    %113 = vmatprep.mubr.bf16.mxu0 0
    %114 = vmatmul.mubr.bf16.gmra.mrb[0].mxu0 %v60
    %v115 = vpop.f32.mrb[0].mxu0
    %v116 = vadd.f32 %v45, %v115
    %v117 = vpop.f32.mrb[0].mxu0
    %v118 = vpop.f32.mrb[0].mxu0
    %v119 = vadd.f32 %v45, %v118
    %v120 = vpop.f32.mrb[0].mxu0
    %121 = vmatprep.mubr.bf16.mxu0 0
    %122 = vmatmul.mubr.bf16.gmra.mrb[0].mxu0 %v63
    %v123 = vpop.f32.mrb[0].mxu0
    %v124 = vadd.f32 %v45, %v123
    %v125 = vpop.f32.mrb[0].mxu0
    %v126 = vpop.f32.mrb[0].mxu0
    %v127 = vadd.f32 %v45, %v126
    %v128 = vpop.f32.mrb[0].mxu0
    %129 = vdwg.mxu0
    %v130 = vmax.f32 %v100, 0.0
    %v131 = vmax.f32 %v103, 0.0
    %v132 = vmax.f32 %v108, 0.0
    %v133 = vmax.f32 %v111, 0.0
    %v134 = vmax.f32 %v116, 0.0
    %v135 = vmax.f32 %v119, 0.0
    %v136 = vmax.f32 %v124, 0.0
    %v137 = vmax.f32 %v127, 0.0
    %v138 = vpack.c.bf16 %v131, %v130
    %v139 = vpack.c.bf16 %v133, %v132
    %v140 = vpack.c.bf16 %v135, %v134
    %v141 = vpack.c.bf16 %v137, %v136
    %v142 = vld [vmem:[#allocation2 + $0x8] sm:$0xf]
    %v143 = vld [vmem:[#allocation2 + $0xc] sm:$0xf]
    %v144 = vld [vmem:[#allocation2 + $0x10] sm:$0xf]
    %v145 = vld [vmem:[#allocation2 + $0x14] sm:$0xf]
    %v146 = vld [vmem:[#allocation2 + $0x18] sm:$0xf]
    %v147 = vld [vmem:[#allocation2 + $0x1c] sm:$0xf]
    %v148 = vld [vmem:[#allocation2 + $0x20] sm:$0xf]
    %v149 = vld [vmem:[#allocation2 + $0x24] sm:$0xf]
    %v150 = vld [vmem:[#allocation2 + $0x28] sm:$0xf]
    %v151 = vld [vmem:[#allocation2 + $0x2c] sm:$0xf]
    %v152 = vld [vmem:[#allocation2 + $0x30] sm:$0xf]
    %v153 = vld [vmem:[#allocation2 + $0x34] sm:$0xf]
    %v154 = vld [vmem:[#allocation2 + $0x38] sm:$0xf]
    %v155 = vld [vmem:[#allocation2 + $0x3c] sm:$0xf]
    %v156 = vld [vmem:[#allocation2 + $0x40] sm:$0xf]
    %v157 = vld [vmem:[#allocation2 + $0x44] sm:$0xf]
    %v158 = vlaneseq
    %v159 = vshrl.u32 %v158, 7
    %v160 = vsub.s32 1, %v159
    %v161 = vrot.slane %v41, %v160
    %v178 = vunpack.c.l.b16 %v142
    %v179 = vunpack.c.l.b16 %v143
    %v180 = vunpack.c.l.b16 %v144
    %v181 = vunpack.c.l.b16 %v145
    %v182 = vunpack.c.l.b16 %v146
    %v183 = vunpack.c.l.b16 %v147
    %v184 = vunpack.c.l.b16 %v148
    %v185 = vunpack.c.l.b16 %v149
    %v186 = vunpack.c.l.b16 %v150
    %v187 = vunpack.c.l.b16 %v151
    %v188 = vunpack.c.l.b16 %v152
    %v189 = vunpack.c.l.b16 %v153
    %v190 = vunpack.c.l.b16 %v154
    %v191 = vunpack.c.l.b16 %v155
    %v192 = vunpack.c.l.b16 %v156
    %v193 = vunpack.c.l.b16 %v157
    %v194 = vpack.c.b16 %v179, %v178
    %v195 = vpack.c.b16 %v181, %v180
    %v196 = vpack.c.b16 %v183, %v182
    %v197 = vpack.c.b16 %v185, %v184
    %v198 = vpack.c.b16 %v187, %v186
    %v199 = vpack.c.b16 %v189, %v188
    %v200 = vpack.c.b16 %v191, %v190
    %v201 = vpack.c.b16 %v193, %v192
    %210 = vmatprep.subr.bf16.mxu0 0
    %211 = vmatpush1.bf16.msra.mxu0 %v194
    %212 = vmatprep.subr.bf16.mxu0 0
    %213 = vmatpush1.bf16.msra.mxu0 %v195
    %214 = vmatprep.subr.bf16.mxu0 0
    %215 = vmatpush1.bf16.msra.mxu0 %v196
    %216 = vmatprep.subr.bf16.mxu0 0
    %217 = vmatpush1.bf16.msra.mxu0 %v197
    %218 = vmatprep.subr.bf16.mxu0 0
    %219 = vmatpush1.bf16.msra.mxu0 %v198
    %220 = vmatprep.subr.bf16.mxu0 0
    %221 = vmatpush1.bf16.msra.mxu0 %v199
    %222 = vmatprep.subr.bf16.mxu0 0
    %223 = vmatpush1.bf16.msra.mxu0 %v200
    %224 = vmatprep.subr.bf16.mxu0 0
    %225 = vmatpush1.bf16.msra.mxu0 %v201
    %226 = vmatprep.subr.bf16.mxu0 0
    %227 = vmatpush1.bf16.msra.mxu0 0
    %228 = vmatprep.subr.bf16.mxu0 0
    %229 = vmatpush1.bf16.msra.mxu0 0
    %230 = vmatprep.subr.bf16.mxu0 0
    %231 = vmatpush1.bf16.msra.mxu0 0
    %232 = vmatprep.subr.bf16.mxu0 0
    %233 = vmatpush1.bf16.msra.mxu0 0
    %234 = vmatprep.subr.bf16.mxu0 0
    %235 = vmatpush1.bf16.msra.mxu0 0
    %236 = vmatprep.subr.bf16.mxu0 0
    %237 = vmatpush1.bf16.msra.mxu0 0
    %238 = vmatprep.subr.bf16.mxu0 0
    %239 = vmatpush1.bf16.msra.mxu0 0
    %240 = vmatprep.subr.bf16.mxu0 0
    %241 = vmatpush1.bf16.msra.mxu0 0
    %242 = vmatprep.mubr.bf16.mxu0 0
    %243 = vmatmul.mubr.bf16.gmra.mrb[0].mxu0 %v138
    %v244 = vpop.f32.mrb[0].mxu0
    %v245 = vadd.f32 %v161, %v244
    %v246 = vpop.f32.mrb[0].mxu0
    %v247 = vpop.f32.mrb[0].mxu0
    %v248 = vadd.f32 %v161, %v247
    %v249 = vpop.f32.mrb[0].mxu0
    %250 = vmatprep.mubr.bf16.mxu0 0
    %251 = vmatmul.mubr.bf16.gmra.mrb[0].mxu0 %v139
    %v252 = vpop.f32.mrb[0].mxu0
    %v253 = vadd.f32 %v161, %v252
    %v254 = vpop.f32.mrb[0].mxu0
    %v255 = vpop.f32.mrb[0].mxu0
    %v256 = vadd.f32 %v161, %v255
    %v257 = vpop.f32.mrb[0].mxu0
    %258 = vmatprep.mubr.bf16.mxu0 0
    %259 = vmatmul.mubr.bf16.gmra.mrb[0].mxu0 %v140
    %v260 = vpop.f32.mrb[0].mxu0
    %v261 = vadd.f32 %v161, %v260
    %v262 = vpop.f32.mrb[0].mxu0
    %v263 = vpop.f32.mrb[0].mxu0
    %v264 = vadd.f32 %v161, %v263
    %v265 = vpop.f32.mrb[0].mxu0
    %266 = vmatprep.mubr.bf16.mxu0 0
    %267 = vmatmul.mubr.bf16.gmra.mrb[0].mxu0 %v141
    %v268 = vpop.f32.mrb[0].mxu0
    %v269 = vadd.f32 %v161, %v268
    %v270 = vpop.f32.mrb[0].mxu0
    %v271 = vpop.f32.mrb[0].mxu0
    %v272 = vadd.f32 %v161, %v271
    %v273 = vpop.f32.mrb[0].mxu0
    %274 = vdwg.mxu0
    %v275 = vmax.f32 %v245, 0.0
    %v276 = vmax.f32 %v248, 0.0
    %v277 = vmax.f32 %v253, 0.0
    %v278 = vmax.f32 %v256, 0.0
    %v279 = vmax.f32 %v261, 0.0
    %v280 = vmax.f32 %v264, 0.0
    %v281 = vmax.f32 %v269, 0.0
    %v282 = vmax.f32 %v272, 0.0
    %v283 = vpack.c.bf16 %v276, %v275
    %v284 = vpack.c.bf16 %v278, %v277
    %v285 = vpack.c.bf16 %v280, %v279
    %v286 = vpack.c.bf16 %v282, %v281
    %v287 = vld [vmem:[#allocation2 + $0x48] sm:$0xf]
    %v288 = vld [vmem:[#allocation2 + $0x4c] sm:$0xf]
    %v289 = vld [vmem:[#allocation2 + $0x50] sm:$0xf]
    %v290 = vld [vmem:[#allocation2 + $0x54] sm:$0xf]
    %v291 = vld [vmem:[#allocation2 + $0x58] sm:$0xf]
    %v292 = vld [vmem:[#allocation2 + $0x5c] sm:$0xf]
    %v293 = vld [vmem:[#allocation2 + $0x60] sm:$0xf]
    %v294 = vld [vmem:[#allocation2 + $0x64] sm:$0xf]
    %v295 = vld [vmem:[#allocation2 + $0x68] sm:$0xf]
    %v296 = vld [vmem:[#allocation2 + $0x6c] sm:$0xf]
    %v297 = vld [vmem:[#allocation2 + $0x70] sm:$0xf]
    %v298 = vld [vmem:[#allocation2 + $0x74] sm:$0xf]
    %v299 = vld [vmem:[#allocation2 + $0x78] sm:$0xf]
    %v300 = vld [vmem:[#allocation2 + $0x7c] sm:$0xf]
    %v301 = vld [vmem:[#allocation2 + $0x80] sm:$0xf]
    %v302 = vld [vmem:[#allocation2 + $0x84] sm:$0xf]
    %v303 = vld [vmem:[#allocation2 + $0xc8] sm:$0x2]
    %v304 = vunpack.c.l.bf16 %v303
    %v305 = vlaneseq
    %v306 = vshrl.u32 %v305, 7
    %v307 = vsub.s32 2, %v306
    %v308 = vrot.slane %v304, %v307
    %v325 = vunpack.c.l.b16 %v287
    %v326 = vunpack.c.l.b16 %v288
    %v327 = vunpack.c.l.b16 %v289
    %v328 = vunpack.c.l.b16 %v290
    %v329 = vunpack.c.l.b16 %v291
    %v330 = vunpack.c.l.b16 %v292
    %v331 = vunpack.c.l.b16 %v293
    %v332 = vunpack.c.l.b16 %v294
    %v333 = vunpack.c.l.b16 %v295
    %v334 = vunpack.c.l.b16 %v296
    %v335 = vunpack.c.l.b16 %v297
    %v336 = vunpack.c.l.b16 %v298
    %v337 = vunpack.c.l.b16 %v299
    %v338 = vunpack.c.l.b16 %v300
    %v339 = vunpack.c.l.b16 %v301
    %v340 = vunpack.c.l.b16 %v302
    %v341 = vpack.c.b16 %v326, %v325
    %v342 = vpack.c.b16 %v328, %v327
    %v343 = vpack.c.b16 %v330, %v329
    %v344 = vpack.c.b16 %v332, %v331
    %v345 = vpack.c.b16 %v334, %v333
    %v346 = vpack.c.b16 %v336, %v335
    %v347 = vpack.c.b16 %v338, %v337
    %v348 = vpack.c.b16 %v340, %v339
    %357 = vmatprep.subr.bf16.mxu0 0
    %358 = vmatpush1.bf16.msra.mxu0 %v341
    %359 = vmatprep.subr.bf16.mxu0 0
    %360 = vmatpush1.bf16.msra.mxu0 %v342
    %361 = vmatprep.subr.bf16.mxu0 0
    %362 = vmatpush1.bf16.msra.mxu0 %v343
    %363 = vmatprep.subr.bf16.mxu0 0
    %364 = vmatpush1.bf16.msra.mxu0 %v344
    %365 = vmatprep.subr.bf16.mxu0 0
    %366 = vmatpush1.bf16.msra.mxu0 %v345
    %367 = vmatprep.subr.bf16.mxu0 0
    %368 = vmatpush1.bf16.msra.mxu0 %v346
    %369 = vmatprep.subr.bf16.mxu0 0
    %370 = vmatpush1.bf16.msra.mxu0 %v347
    %371 = vmatprep.subr.bf16.mxu0 0
    %372 = vmatpush1.bf16.msra.mxu0 %v348
    %373 = vmatprep.subr.bf16.mxu0 0
    %374 = vmatpush1.bf16.msra.mxu0 0
    %375 = vmatprep.subr.bf16.mxu0 0
    %376 = vmatpush1.bf16.msra.mxu0 0
    %377 = vmatprep.subr.bf16.mxu0 0
    %378 = vmatpush1.bf16.msra.mxu0 0
    %379 = vmatprep.subr.bf16.mxu0 0
    %380 = vmatpush1.bf16.msra.mxu0 0
    %381 = vmatprep.subr.bf16.mxu0 0
    %382 = vmatpush1.bf16.msra.mxu0 0
    %383 = vmatprep.subr.bf16.mxu0 0
    %384 = vmatpush1.bf16.msra.mxu0 0
    %385 = vmatprep.subr.bf16.mxu0 0
    %386 = vmatpush1.bf16.msra.mxu0 0
    %387 = vmatprep.subr.bf16.mxu0 0
    %388 = vmatpush1.bf16.msra.mxu0 0
    %389 = vmatprep.mubr.bf16.mxu0 0
    %390 = vmatmul.mubr.bf16.gmra.mrb[0].mxu0 %v283
    %v391 = vpop.f32.mrb[0].mxu0
    %v392 = vadd.f32 %v308, %v391
    %v393 = vpop.f32.mrb[0].mxu0
    %v394 = vpop.f32.mrb[0].mxu0
    %v395 = vadd.f32 %v308, %v394
    %v396 = vpop.f32.mrb[0].mxu0
    %397 = vmatprep.mubr.bf16.mxu0 0
    %398 = vmatmul.mubr.bf16.gmra.mrb[0].mxu0 %v284
    %v399 = vpop.f32.mrb[0].mxu0
    %v400 = vadd.f32 %v308, %v399
    %v401 = vpop.f32.mrb[0].mxu0
    %v402 = vpop.f32.mrb[0].mxu0
    %v403 = vadd.f32 %v308, %v402
    %v404 = vpop.f32.mrb[0].mxu0
    %405 = vmatprep.mubr.bf16.mxu0 0
    %406 = vmatmul.mubr.bf16.gmra.mrb[0].mxu0 %v285
    %v407 = vpop.f32.mrb[0].mxu0
    %v408 = vadd.f32 %v308, %v407
    %v409 = vpop.f32.mrb[0].mxu0
    %v410 = vpop.f32.mrb[0].mxu0
    %v411 = vadd.f32 %v308, %v410
    %v412 = vpop.f32.mrb[0].mxu0
    %413 = vmatprep.mubr.bf16.mxu0 0
    %414 = vmatmul.mubr.bf16.gmra.mrb[0].mxu0 %v286
    %v415 = vpop.f32.mrb[0].mxu0
    %v416 = vadd.f32 %v308, %v415
    %v417 = vpop.f32.mrb[0].mxu0
    %v418 = vpop.f32.mrb[0].mxu0
    %v419 = vadd.f32 %v308, %v418
    %v420 = vpop.f32.mrb[0].mxu0
    %421 = vdwg.mxu0
    %v422 = vmax.f32 %v392, 0.0
    %v423 = vmax.f32 %v395, 0.0
    %v424 = vmax.f32 %v400, 0.0
    %v425 = vmax.f32 %v403, 0.0
    %v426 = vmax.f32 %v408, 0.0
    %v427 = vmax.f32 %v411, 0.0
    %v428 = vmax.f32 %v416, 0.0
    %v429 = vmax.f32 %v419, 0.0
    %v430 = vpack.c.bf16 %v423, %v422
    %v431 = vpack.c.bf16 %v425, %v424
    %v432 = vpack.c.bf16 %v427, %v426
    %v433 = vpack.c.bf16 %v429, %v428
    %v434 = vld [vmem:[#allocation2 + $0x88] sm:$0xf]
    %v435 = vld [vmem:[#allocation2 + $0x8c] sm:$0xf]
    %v436 = vld [vmem:[#allocation2 + $0x90] sm:$0xf]
    %v437 = vld [vmem:[#allocation2 + $0x94] sm:$0xf]
    %v438 = vld [vmem:[#allocation2 + $0x98] sm:$0xf]
    %v439 = vld [vmem:[#allocation2 + $0x9c] sm:$0xf]
    %v440 = vld [vmem:[#allocation2 + $0xa0] sm:$0xf]
    %v441 = vld [vmem:[#allocation2 + $0xa4] sm:$0xf]
    %v442 = vld [vmem:[#allocation2 + $0xa8] sm:$0xf]
    %v443 = vld [vmem:[#allocation2 + $0xac] sm:$0xf]
    %v444 = vld [vmem:[#allocation2 + $0xb0] sm:$0xf]
    %v445 = vld [vmem:[#allocation2 + $0xb4] sm:$0xf]
    %v446 = vld [vmem:[#allocation2 + $0xb8] sm:$0xf]
    %v447 = vld [vmem:[#allocation2 + $0xbc] sm:$0xf]
    %v448 = vld [vmem:[#allocation2 + $0xc0] sm:$0xf]
    %v449 = vld [vmem:[#allocation2 + $0xc4] sm:$0xf]
    %v450 = vlaneseq
    %v451 = vshrl.u32 %v450, 7
    %v452 = vsub.s32 3, %v451
    %v453 = vrot.slane %v304, %v452
    %v470 = vunpack.c.l.b16 %v434
    %v471 = vunpack.c.l.b16 %v435
    %v472 = vunpack.c.l.b16 %v436
    %v473 = vunpack.c.l.b16 %v437
    %v474 = vunpack.c.l.b16 %v438
    %v475 = vunpack.c.l.b16 %v439
    %v476 = vunpack.c.l.b16 %v440
    %v477 = vunpack.c.l.b16 %v441
    %v478 = vunpack.c.l.b16 %v442
    %v479 = vunpack.c.l.b16 %v443
    %v480 = vunpack.c.l.b16 %v444
    %v481 = vunpack.c.l.b16 %v445
    %v482 = vunpack.c.l.b16 %v446
    %v483 = vunpack.c.l.b16 %v447
    %v484 = vunpack.c.l.b16 %v448
    %v485 = vunpack.c.l.b16 %v449
    %v486 = vpack.c.b16 %v471, %v470
    %v487 = vpack.c.b16 %v473, %v472
    %v488 = vpack.c.b16 %v475, %v474
    %v489 = vpack.c.b16 %v477, %v476
    %v490 = vpack.c.b16 %v479, %v478
    %v491 = vpack.c.b16 %v481, %v480
    %v492 = vpack.c.b16 %v483, %v482
    %v493 = vpack.c.b16 %v485, %v484
    %502 = vmatprep.subr.bf16.mxu0 0
    %503 = vmatpush1.bf16.msra.mxu0 %v486
    %504 = vmatprep.subr.bf16.mxu0 0
    %505 = vmatpush1.bf16.msra.mxu0 %v487
    %506 = vmatprep.subr.bf16.mxu0 0
    %507 = vmatpush1.bf16.msra.mxu0 %v488
    %508 = vmatprep.subr.bf16.mxu0 0
    %509 = vmatpush1.bf16.msra.mxu0 %v489
    %510 = vmatprep.subr.bf16.mxu0 0
    %511 = vmatpush1.bf16.msra.mxu0 %v490
    %512 = vmatprep.subr.bf16.mxu0 0
    %513 = vmatpush1.bf16.msra.mxu0 %v491
    %514 = vmatprep.subr.bf16.mxu0 0
    %515 = vmatpush1.bf16.msra.mxu0 %v492
    %516 = vmatprep.subr.bf16.mxu0 0
    %517 = vmatpush1.bf16.msra.mxu0 %v493
    %518 = vmatprep.subr.bf16.mxu0 0
    %519 = vmatpush1.bf16.msra.mxu0 0
    %520 = vmatprep.subr.bf16.mxu0 0
    %521 = vmatpush1.bf16.msra.mxu0 0
    %522 = vmatprep.subr.bf16.mxu0 0
    %523 = vmatpush1.bf16.msra.mxu0 0
    %524 = vmatprep.subr.bf16.mxu0 0
    %525 = vmatpush1.bf16.msra.mxu0 0
    %526 = vmatprep.subr.bf16.mxu0 0
    %527 = vmatpush1.bf16.msra.mxu0 0
    %528 = vmatprep.subr.bf16.mxu0 0
    %529 = vmatpush1.bf16.msra.mxu0 0
    %530 = vmatprep.subr.bf16.mxu0 0
    %531 = vmatpush1.bf16.msra.mxu0 0
    %532 = vmatprep.subr.bf16.mxu0 0
    %533 = vmatpush1.bf16.msra.mxu0 0
    %534 = vmatprep.mubr.bf16.mxu0 0
    %535 = vmatmul.mubr.bf16.gmra.mrb[0].mxu0 %v430
    %v536 = vpop.f32.mrb[0].mxu0
    %v537 = vadd.f32 %v453, %v536
    %v538 = vpop.f32.mrb[0].mxu0
    %v539 = vpop.f32.mrb[0].mxu0
    %v540 = vadd.f32 %v453, %v539
    %v541 = vpop.f32.mrb[0].mxu0
    %542 = vmatprep.mubr.bf16.mxu0 0
    %543 = vmatmul.mubr.bf16.gmra.mrb[0].mxu0 %v431
    %v544 = vpop.f32.mrb[0].mxu0
    %v545 = vadd.f32 %v453, %v544
    %v546 = vpop.f32.mrb[0].mxu0
    %v547 = vpop.f32.mrb[0].mxu0
    %v548 = vadd.f32 %v453, %v547
    %v549 = vpop.f32.mrb[0].mxu0
    %550 = vmatprep.mubr.bf16.mxu0 0
    %551 = vmatmul.mubr.bf16.gmra.mrb[0].mxu0 %v432
    %v552 = vpop.f32.mrb[0].mxu0
    %v553 = vadd.f32 %v453, %v552
    %v554 = vpop.f32.mrb[0].mxu0
    %v555 = vpop.f32.mrb[0].mxu0
    %v556 = vadd.f32 %v453, %v555
    %v557 = vpop.f32.mrb[0].mxu0
    %558 = vmatprep.mubr.bf16.mxu0 0
    %559 = vmatmul.mubr.bf16.gmra.mrb[0].mxu0 %v433
    %v560 = vpop.f32.mrb[0].mxu0
    %v561 = vadd.f32 %v453, %v560
    %v562 = vpop.f32.mrb[0].mxu0
    %v563 = vpop.f32.mrb[0].mxu0
    %v564 = vadd.f32 %v453, %v563
    %v565 = vpop.f32.mrb[0].mxu0
    %566 = vdwg.mxu0
    %v567 = vlaneseq
    %v568 = vand.u32 %v567, 127
    %vm569 = vcmp.lt.s32.totalorder %v568, 8
    %v570 = vtanh.pop %v537
    %v571 = vtanh.pop %v540
    %v572 = vtanh.pop %v545
    %v573 = vtanh.pop %v548
    %v574 = vtanh.pop %v553
    %v575 = vtanh.pop %v556
    %v576 = vtanh.pop %v561
    %v577 = vtanh.pop %v564
    %v578 = vsel %vm569, %v570, %v537
    %v579 = vsel %vm569, %v571, %v540
    %v580 = vsel %vm569, %v572, %v545
    %v581 = vsel %vm569, %v573, %v548
    %v582 = vsel %vm569, %v574, %v553
    %v583 = vsel %vm569, %v575, %v556
    %v584 = vsel %vm569, %v576, %v561
    %v585 = vsel %vm569, %v577, %v564
    %586 = vst.msk [vmem:[%s2] sm:$0xff] %vm52, %v578
    %587 = vst.msk [vmem:[%s2 + $0x8] sm:$0xff] %vm52, %v579
    %588 = vst.msk [vmem:[%s2 + $0x10] sm:$0xff] %vm52, %v580
    %589 = vst.msk [vmem:[%s2 + $0x18] sm:$0xff] %vm52, %v581
    %590 = vst.msk [vmem:[%s2 + $0x20] sm:$0xff] %vm52, %v582
    %591 = vst.msk [vmem:[%s2 + $0x28] sm:$0xff] %vm52, %v583
    %592 = vst.msk [vmem:[%s2 + $0x30] sm:$0xff] %vm52, %v584
    %593 = vst.msk [vmem:[%s2 + $0x38] sm:$0xff] %vm52, %v585
    // Predicated region
    $region14: #{tpu_custom_call.1} parent=1 // pred_check
      _
    $region15: #{tpu_custom_call.1} parent=1 // pred_check_branch
      %595 = sbr.rel (0) target = $region17
    $region16: #{tpu_custom_call.1} parent=1 // pred_region
      _
    $region17: #{tpu_custom_call.1} parent=1 // pred_fallthru
      _
    // Predicated region
    $region18: #{tpu_custom_call.1} parent=1 // pred_check
      _
    $region19: #{tpu_custom_call.1} parent=1 // pred_check_branch
      %597 = sbr.rel (0) target = $region21
    $region20: #{tpu_custom_call.1} parent=1 // pred_region
      _
    $region21: #{tpu_custom_call.1} parent=1 // pred_fallthru
      _
    %598 = vsyncpa [#allocation3], 1

// kernel: tpu_custom_call.1
$region0: #{tpu_custom_call.1}
  #allocation0 [shape = 'u32[]', space=smem, size = 0x4, offset = 0x4, fixed_abs, tag = 'smem constant byte address 0x4 - core index']
  #allocation1 [shape = 'u32[144,128]{1,0:T(1,128)}', space=vmem, size = 0x12000, scoped, tag = 'internal scratch']
  %s0 = inlined_call_operand.vmem [shape: f32[64,16], index: 0, kind: input, shape index: {}]
  %s1 = inlined_call_operand.hbm [shape: bf16[408,128], index: 1, kind: input, shape index: {}]
  %s2 = inlined_call_operand.vmem [shape: f32[64,16], index: 2, kind: output, shape index: {}]
  %s3 = sld [smem:[#allocation0]]
  $region22: #{tpu_custom_call.1} parent=0
    _
  %s5 = ssub.s32 1, %s3
  %s6 = scalar_select 0, %s5, %s3
  $region1: #{tpu_custom_call.1} parent=0
    #allocation2 [shape = 'u8[104448]{0}', space=vmem, size = 0x19800, scoped, tag = 'input window, operand 1, single buffered']
    #allocation3 [shape = 's32[1]{0}', space=sflag, size = 0x4, scoped, tag = 'scoped memory for tpu_custom_call.1']
    %7 = vsyncpa [#allocation3], 0
    // Predicated region
    $region2: #{tpu_custom_call.1} parent=1 // pred_check
      _
    $region3: #{tpu_custom_call.1} parent=1 // pred_check_branch
      %9 = sbr.rel (0) target = $region5
    $region4: #{tpu_custom_call.1} parent=1 // pred_region
      _
    $region5: #{tpu_custom_call.1} parent=1 // pred_fallthru
      _
    // Predicated region
    $region6: #{tpu_custom_call.1} parent=1 // pred_check
      _
    $region7: #{tpu_custom_call.1} parent=1 // pred_check_branch
      %11 = sbr.rel (0) target = $region9
    $region8: #{tpu_custom_call.1} parent=1 // pred_region
      %s13 = ssub.s32 3264, 3264
      %14 = vsyncadd [#allocation3], %s13
      %s15 = sshll.u32 [#allocation2], 4
      %s16 = int_to_ptr.vmem [resolvable:$true] %s15
      %21 = dma.hbm_to_vmem [thread:$0]  %s1, 3264, %s16, [#allocation3], 64, 64, 4
    $region9: #{tpu_custom_call.1} parent=1 // pred_fallthru
      _
    // Predicated region
    $region10: #{tpu_custom_call.1} parent=1 // pred_check
      _
    $region11: #{tpu_custom_call.1} parent=1 // pred_check_branch
      %23 = sbr.rel (0) target = $region13
    $region12: #{tpu_custom_call.1} parent=1 // pred_region
      %24 = dma.done [#allocation3], 3264
    $region13: #{tpu_custom_call.1} parent=1 // pred_fallthru
      _
    %v26 = vld [vmem:[%s0] sm:$0xff]
    %v27 = vld [vmem:[%s0 + $0x8] sm:$0xff]
    %v28 = vld [vmem:[%s0 + $0x10] sm:$0xff]
    %v29 = vld [vmem:[%s0 + $0x18] sm:$0xff]
    %v30 = vld [vmem:[%s0 + $0x20] sm:$0xff]
    %v31 = vld [vmem:[%s0 + $0x28] sm:$0xff]
    %v32 = vld [vmem:[%s0 + $0x30] sm:$0xff]
    %v33 = vld [vmem:[%s0 + $0x38] sm:$0xff]
    %v34 = vpack.c.bf16 %v27, %v26
    %v35 = vpack.c.bf16 %v29, %v28
    %v36 = vpack.c.bf16 %v31, %v30
    %v37 = vpack.c.bf16 %v33, %v32
    %v38 = vld [vmem:[#allocation2] sm:$0xf]
    %v39 = vld [vmem:[#allocation2 + $0x4] sm:$0xf]
    %v40 = vld [vmem:[#allocation2 + $0xc8] sm:$0x1]
    %v41 = vunpack.c.l.bf16 %v40
    %v42 = vlaneseq
    %v43 = vshrl.u32 %v42, 7
    %v44 = vsub.s32 0, %v43
    %v45 = vrot.slane %v41, %v44
    %v48 = vunpack.c.l.b16 %v38
    %v49 = vunpack.c.l.b16 %v39
    %v50 = vpack.c.b16 %v49, %v48
    %vm52 = vcmask 130048
    %v54 = vsel %vm52, %v34, 0
    %v57 = vsel %vm52, %v35, 0
    %v60 = vsel %vm52, %v36, 0
    %v63 = vsel %vm52, %v37, 0
    %65 = vmatprep.subr.bf16.mxu0 0
    %66 = vmatpush1.bf16.msra.mxu0 %v50
    %67 = vmatprep.subr.bf16.mxu0 0
    %68 = vmatpush1.bf16.msra.mxu0 0
    %69 = vmatprep.subr.bf16.mxu0 0
    %70 = vmatpush1.bf16.msra.mxu0 0
    %71 = vmatprep.subr.bf16.mxu0 0
    %72 = vmatpush1.bf16.msra.mxu0 0
    %73 = vmatprep.subr.bf16.mxu0 0
    %74 = vmatpush1.bf16.msra.mxu0 0
    %75 = vmatprep.subr.bf16.mxu0 0
    %76 = vmatpush1.bf16.msra.mxu0 0
    %77 = vmatprep.subr.bf16.mxu0 0
    %78 = vmatpush1.bf16.msra.mxu0 0
    %79 = vmatprep.subr.bf16.mxu0 0
    %80 = vmatpush1.bf16.msra.mxu0 0
    %81 = vmatprep.subr.bf16.mxu0 0
    %82 = vmatpush1.bf16.msra.mxu0 0
    %83 = vmatprep.subr.bf16.mxu0 0
    %84 = vmatpush1.bf16.msra.mxu0 0
    %85 = vmatprep.subr.bf16.mxu0 0
    %86 = vmatpush1.bf16.msra.mxu0 0
    %87 = vmatprep.subr.bf16.mxu0 0
    %88 = vmatpush1.bf16.msra.mxu0 0
    %89 = vmatprep.subr.bf16.mxu0 0
    %90 = vmatpush1.bf16.msra.mxu0 0
    %91 = vmatprep.subr.bf16.mxu0 0
    %92 = vmatpush1.bf16.msra.mxu0 0
    %93 = vmatprep.subr.bf16.mxu0 0
    %94 = vmatpush1.bf16.msra.mxu0 0
    %95 = vmatprep.subr.bf16.mxu0 0
    %96 = vmatpush1.bf16.msra.mxu0 0
    %97 = vmatprep.mubr.bf16.mxu0 0
    %98 = vmatmul.mubr.bf16.gmra.mrb[0].mxu0 %v54
    %v99 = vpop.f32.mrb[0].mxu0
    %v100 = vadd.f32 %v45, %v99
    %v101 = vpop.f32.mrb[0].mxu0
    %v102 = vpop.f32.mrb[0].mxu0
    %v103 = vadd.f32 %v45, %v102
    %v104 = vpop.f32.mrb[0].mxu0
    %105 = vmatprep.mubr.bf16.mxu0 0
    %106 = vmatmul.mubr.bf16.gmra.mrb[0].mxu0 %v57
    %v107 = vpop.f32.mrb[0].mxu0
    %v108 = vadd.f32 %v45, %v107
    %v109 = vpop.f32.mrb[0].mxu0
    %v110 = vpop.f32.mrb[0].mxu0
    %v111 = vadd.f32 %v45, %v110
    %v112 = vpop.f32.mrb[0].mxu0
    %113 = vmatprep.mubr.bf16.mxu0 0
    %114 = vmatmul.mubr.bf16.gmra.mrb[0].mxu0 %v60
    %v115 = vpop.f32.mrb[0].mxu0
    %v116 = vadd.f32 %v45, %v115
    %v117 = vpop.f32.mrb[0].mxu0
    %v118 = vpop.f32.mrb[0].mxu0
    %v119 = vadd.f32 %v45, %v118
    %v120 = vpop.f32.mrb[0].mxu0
    %121 = vmatprep.mubr.bf16.mxu0 0
    %122 = vmatmul.mubr.bf16.gmra.mrb[0].mxu0 %v63
    %v123 = vpop.f32.mrb[0].mxu0
    %v124 = vadd.f32 %v45, %v123
    %v125 = vpop.f32.mrb[0].mxu0
    %v126 = vpop.f32.mrb[0].mxu0
    %v127 = vadd.f32 %v45, %v126
    %v128 = vpop.f32.mrb[0].mxu0
    %129 = vdwg.mxu0
    %v130 = vmax.f32 %v100, 0.0
    %v131 = vmax.f32 %v103, 0.0
    %v132 = vmax.f32 %v108, 0.0
    %v133 = vmax.f32 %v111, 0.0
    %v134 = vmax.f32 %v116, 0.0
    %v135 = vmax.f32 %v119, 0.0
    %v136 = vmax.f32 %v124, 0.0
    %v137 = vmax.f32 %v127, 0.0
    %v138 = vpack.c.bf16 %v131, %v130
    %v139 = vpack.c.bf16 %v133, %v132
    %v140 = vpack.c.bf16 %v135, %v134
    %v141 = vpack.c.bf16 %v137, %v136
    %v142 = vld [vmem:[#allocation2 + $0x8] sm:$0xf]
    %v143 = vld [vmem:[#allocation2 + $0xc] sm:$0xf]
    %v144 = vld [vmem:[#allocation2 + $0x10] sm:$0xf]
    %v145 = vld [vmem:[#allocation2 + $0x14] sm:$0xf]
    %v146 = vld [vmem:[#allocation2 + $0x18] sm:$0xf]
    %v147 = vld [vmem:[#allocation2 + $0x1c] sm:$0xf]
    %v148 = vld [vmem:[#allocation2 + $0x20] sm:$0xf]
    %v149 = vld [vmem:[#allocation2 + $0x24] sm:$0xf]
    %v150 = vld [vmem:[#allocation2 + $0x28] sm:$0xf]
    %v151 = vld [vmem:[#allocation2 + $0x2c] sm:$0xf]
    %v152 = vld [vmem:[#allocation2 + $0x30] sm:$0xf]
    %v153 = vld [vmem:[#allocation2 + $0x34] sm:$0xf]
    %v154 = vld [vmem:[#allocation2 + $0x38] sm:$0xf]
    %v155 = vld [vmem:[#allocation2 + $0x3c] sm:$0xf]
    %v156 = vld [vmem:[#allocation2 + $0x40] sm:$0xf]
    %v157 = vld [vmem:[#allocation2 + $0x44] sm:$0xf]
    %v158 = vlaneseq
    %v159 = vshrl.u32 %v158, 7
    %v160 = vsub.s32 1, %v159
    %v161 = vrot.slane %v41, %v160
    %v178 = vunpack.c.l.b16 %v142
    %v179 = vunpack.c.l.b16 %v143
    %v180 = vunpack.c.l.b16 %v144
    %v181 = vunpack.c.l.b16 %v145
    %v182 = vunpack.c.l.b16 %v146
    %v183 = vunpack.c.l.b16 %v147
    %v184 = vunpack.c.l.b16 %v148
    %v185 = vunpack.c.l.b16 %v149
    %v186 = vunpack.c.l.b16 %v150
    %v187 = vunpack.c.l.b16 %v151
    %v188 = vunpack.c.l.b16 %v152
    %v189 = vunpack.c.l.b16 %v153
    %v190 = vunpack.c.l.b16 %v154
    %v191 = vunpack.c.l.b16 %v155
    %v192 = vunpack.c.l.b16 %v156
    %v193 = vunpack.c.l.b16 %v157
    %v194 = vpack.c.b16 %v179, %v178
    %v195 = vpack.c.b16 %v181, %v180
    %v196 = vpack.c.b16 %v183, %v182
    %v197 = vpack.c.b16 %v185, %v184
    %v198 = vpack.c.b16 %v187, %v186
    %v199 = vpack.c.b16 %v189, %v188
    %v200 = vpack.c.b16 %v191, %v190
    %v201 = vpack.c.b16 %v193, %v192
    %210 = vmatprep.subr.bf16.mxu0 0
    %211 = vmatpush1.bf16.msra.mxu0 %v194
    %212 = vmatprep.subr.bf16.mxu0 0
    %213 = vmatpush1.bf16.msra.mxu0 %v195
    %214 = vmatprep.subr.bf16.mxu0 0
    %215 = vmatpush1.bf16.msra.mxu0 %v196
    %216 = vmatprep.subr.bf16.mxu0 0
    %217 = vmatpush1.bf16.msra.mxu0 %v197
    %218 = vmatprep.subr.bf16.mxu0 0
    %219 = vmatpush1.bf16.msra.mxu0 %v198
    %220 = vmatprep.subr.bf16.mxu0 0
    %221 = vmatpush1.bf16.msra.mxu0 %v199
    %222 = vmatprep.subr.bf16.mxu0 0
    %223 = vmatpush1.bf16.msra.mxu0 %v200
    %224 = vmatprep.subr.bf16.mxu0 0
    %225 = vmatpush1.bf16.msra.mxu0 %v201
    %226 = vmatprep.subr.bf16.mxu0 0
    %227 = vmatpush1.bf16.msra.mxu0 0
    %228 = vmatprep.subr.bf16.mxu0 0
    %229 = vmatpush1.bf16.msra.mxu0 0
    %230 = vmatprep.subr.bf16.mxu0 0
    %231 = vmatpush1.bf16.msra.mxu0 0
    %232 = vmatprep.subr.bf16.mxu0 0
    %233 = vmatpush1.bf16.msra.mxu0 0
    %234 = vmatprep.subr.bf16.mxu0 0
    %235 = vmatpush1.bf16.msra.mxu0 0
    %236 = vmatprep.subr.bf16.mxu0 0
    %237 = vmatpush1.bf16.msra.mxu0 0
    %238 = vmatprep.subr.bf16.mxu0 0
    %239 = vmatpush1.bf16.msra.mxu0 0
    %240 = vmatprep.subr.bf16.mxu0 0
    %241 = vmatpush1.bf16.msra.mxu0 0
    %242 = vmatprep.mubr.bf16.mxu0 0
    %243 = vmatmul.mubr.bf16.gmra.mrb[0].mxu0 %v138
    %v244 = vpop.f32.mrb[0].mxu0
    %v245 = vadd.f32 %v161, %v244
    %v246 = vpop.f32.mrb[0].mxu0
    %v247 = vpop.f32.mrb[0].mxu0
    %v248 = vadd.f32 %v161, %v247
    %v249 = vpop.f32.mrb[0].mxu0
    %250 = vmatprep.mubr.bf16.mxu0 0
    %251 = vmatmul.mubr.bf16.gmra.mrb[0].mxu0 %v139
    %v252 = vpop.f32.mrb[0].mxu0
    %v253 = vadd.f32 %v161, %v252
    %v254 = vpop.f32.mrb[0].mxu0
    %v255 = vpop.f32.mrb[0].mxu0
    %v256 = vadd.f32 %v161, %v255
    %v257 = vpop.f32.mrb[0].mxu0
    %258 = vmatprep.mubr.bf16.mxu0 0
    %259 = vmatmul.mubr.bf16.gmra.mrb[0].mxu0 %v140
    %v260 = vpop.f32.mrb[0].mxu0
    %v261 = vadd.f32 %v161, %v260
    %v262 = vpop.f32.mrb[0].mxu0
    %v263 = vpop.f32.mrb[0].mxu0
    %v264 = vadd.f32 %v161, %v263
    %v265 = vpop.f32.mrb[0].mxu0
    %266 = vmatprep.mubr.bf16.mxu0 0
    %267 = vmatmul.mubr.bf16.gmra.mrb[0].mxu0 %v141
    %v268 = vpop.f32.mrb[0].mxu0
    %v269 = vadd.f32 %v161, %v268
    %v270 = vpop.f32.mrb[0].mxu0
    %v271 = vpop.f32.mrb[0].mxu0
    %v272 = vadd.f32 %v161, %v271
    %v273 = vpop.f32.mrb[0].mxu0
    %274 = vdwg.mxu0
    %v275 = vmax.f32 %v245, 0.0
    %v276 = vmax.f32 %v248, 0.0
    %v277 = vmax.f32 %v253, 0.0
    %v278 = vmax.f32 %v256, 0.0
    %v279 = vmax.f32 %v261, 0.0
    %v280 = vmax.f32 %v264, 0.0
    %v281 = vmax.f32 %v269, 0.0
    %v282 = vmax.f32 %v272, 0.0
    %v283 = vpack.c.bf16 %v276, %v275
    %v284 = vpack.c.bf16 %v278, %v277
    %v285 = vpack.c.bf16 %v280, %v279
    %v286 = vpack.c.bf16 %v282, %v281
    %v287 = vld [vmem:[#allocation2 + $0x48] sm:$0xf]
    %v288 = vld [vmem:[#allocation2 + $0x4c] sm:$0xf]
    %v289 = vld [vmem:[#allocation2 + $0x50] sm:$0xf]
    %v290 = vld [vmem:[#allocation2 + $0x54] sm:$0xf]
    %v291 = vld [vmem:[#allocation2 + $0x58] sm:$0xf]
    %v292 = vld [vmem:[#allocation2 + $0x5c] sm:$0xf]
    %v293 = vld [vmem:[#allocation2 + $0x60] sm:$0xf]
    %v294 = vld [vmem:[#allocation2 + $0x64] sm:$0xf]
    %v295 = vld [vmem:[#allocation2 + $0x68] sm:$0xf]
    %v296 = vld [vmem:[#allocation2 + $0x6c] sm:$0xf]
    %v297 = vld [vmem:[#allocation2 + $0x70] sm:$0xf]
    %v298 = vld [vmem:[#allocation2 + $0x74] sm:$0xf]
    %v299 = vld [vmem:[#allocation2 + $0x78] sm:$0xf]
    %v300 = vld [vmem:[#allocation2 + $0x7c] sm:$0xf]
    %v301 = vld [vmem:[#allocation2 + $0x80] sm:$0xf]
    %v302 = vld [vmem:[#allocation2 + $0x84] sm:$0xf]
    %v303 = vld [vmem:[#allocation2 + $0xc8] sm:$0x2]
    %v304 = vunpack.c.l.bf16 %v303
    %v305 = vlaneseq
    %v306 = vshrl.u32 %v305, 7
    %v307 = vsub.s32 2, %v306
    %v308 = vrot.slane %v304, %v307
    %v325 = vunpack.c.l.b16 %v287
    %v326 = vunpack.c.l.b16 %v288
    %v327 = vunpack.c.l.b16 %v289
    %v328 = vunpack.c.l.b16 %v290
    %v329 = vunpack.c.l.b16 %v291
    %v330 = vunpack.c.l.b16 %v292
    %v331 = vunpack.c.l.b16 %v293
    %v332 = vunpack.c.l.b16 %v294
    %v333 = vunpack.c.l.b16 %v295
    %v334 = vunpack.c.l.b16 %v296
    %v335 = vunpack.c.l.b16 %v297
    %v336 = vunpack.c.l.b16 %v298
    %v337 = vunpack.c.l.b16 %v299
    %v338 = vunpack.c.l.b16 %v300
    %v339 = vunpack.c.l.b16 %v301
    %v340 = vunpack.c.l.b16 %v302
    %v341 = vpack.c.b16 %v326, %v325
    %v342 = vpack.c.b16 %v328, %v327
    %v343 = vpack.c.b16 %v330, %v329
    %v344 = vpack.c.b16 %v332, %v331
    %v345 = vpack.c.b16 %v334, %v333
    %v346 = vpack.c.b16 %v336, %v335
    %v347 = vpack.c.b16 %v338, %v337
    %v348 = vpack.c.b16 %v340, %v339
    %357 = vmatprep.subr.bf16.mxu0 0
    %358 = vmatpush1.bf16.msra.mxu0 %v341
    %359 = vmatprep.subr.bf16.mxu0 0
    %360 = vmatpush1.bf16.msra.mxu0 %v342
    %361 = vmatprep.subr.bf16.mxu0 0
    %362 = vmatpush1.bf16.msra.mxu0 %v343
    %363 = vmatprep.subr.bf16.mxu0 0
    %364 = vmatpush1.bf16.msra.mxu0 %v344
    %365 = vmatprep.subr.bf16.mxu0 0
    %366 = vmatpush1.bf16.msra.mxu0 %v345
    %367 = vmatprep.subr.bf16.mxu0 0
    %368 = vmatpush1.bf16.msra.mxu0 %v346
    %369 = vmatprep.subr.bf16.mxu0 0
    %370 = vmatpush1.bf16.msra.mxu0 %v347
    %371 = vmatprep.subr.bf16.mxu0 0
    %372 = vmatpush1.bf16.msra.mxu0 %v348
    %373 = vmatprep.subr.bf16.mxu0 0
    %374 = vmatpush1.bf16.msra.mxu0 0
    %375 = vmatprep.subr.bf16.mxu0 0
    %376 = vmatpush1.bf16.msra.mxu0 0
    %377 = vmatprep.subr.bf16.mxu0 0
    %378 = vmatpush1.bf16.msra.mxu0 0
    %379 = vmatprep.subr.bf16.mxu0 0
    %380 = vmatpush1.bf16.msra.mxu0 0
    %381 = vmatprep.subr.bf16.mxu0 0
    %382 = vmatpush1.bf16.msra.mxu0 0
    %383 = vmatprep.subr.bf16.mxu0 0
    %384 = vmatpush1.bf16.msra.mxu0 0
    %385 = vmatprep.subr.bf16.mxu0 0
    %386 = vmatpush1.bf16.msra.mxu0 0
    %387 = vmatprep.subr.bf16.mxu0 0
    %388 = vmatpush1.bf16.msra.mxu0 0
    %389 = vmatprep.mubr.bf16.mxu0 0
    %390 = vmatmul.mubr.bf16.gmra.mrb[0].mxu0 %v283
    %v391 = vpop.f32.mrb[0].mxu0
    %v392 = vadd.f32 %v308, %v391
    %v393 = vpop.f32.mrb[0].mxu0
    %v394 = vpop.f32.mrb[0].mxu0
    %v395 = vadd.f32 %v308, %v394
    %v396 = vpop.f32.mrb[0].mxu0
    %397 = vmatprep.mubr.bf16.mxu0 0
    %398 = vmatmul.mubr.bf16.gmra.mrb[0].mxu0 %v284
    %v399 = vpop.f32.mrb[0].mxu0
    %v400 = vadd.f32 %v308, %v399
    %v401 = vpop.f32.mrb[0].mxu0
    %v402 = vpop.f32.mrb[0].mxu0
    %v403 = vadd.f32 %v308, %v402
    %v404 = vpop.f32.mrb[0].mxu0
    %405 = vmatprep.mubr.bf16.mxu0 0
    %406 = vmatmul.mubr.bf16.gmra.mrb[0].mxu0 %v285
    %v407 = vpop.f32.mrb[0].mxu0
    %v408 = vadd.f32 %v308, %v407
    %v409 = vpop.f32.mrb[0].mxu0
    %v410 = vpop.f32.mrb[0].mxu0
    %v411 = vadd.f32 %v308, %v410
    %v412 = vpop.f32.mrb[0].mxu0
    %413 = vmatprep.mubr.bf16.mxu0 0
    %414 = vmatmul.mubr.bf16.gmra.mrb[0].mxu0 %v286
    %v415 = vpop.f32.mrb[0].mxu0
    %v416 = vadd.f32 %v308, %v415
    %v417 = vpop.f32.mrb[0].mxu0
    %v418 = vpop.f32.mrb[0].mxu0
    %v419 = vadd.f32 %v308, %v418
    %v420 = vpop.f32.mrb[0].mxu0
    %421 = vdwg.mxu0
    %v422 = vmax.f32 %v392, 0.0
    %v423 = vmax.f32 %v395, 0.0
    %v424 = vmax.f32 %v400, 0.0
    %v425 = vmax.f32 %v403, 0.0
    %v426 = vmax.f32 %v408, 0.0
    %v427 = vmax.f32 %v411, 0.0
    %v428 = vmax.f32 %v416, 0.0
    %v429 = vmax.f32 %v419, 0.0
    %v430 = vpack.c.bf16 %v423, %v422
    %v431 = vpack.c.bf16 %v425, %v424
    %v432 = vpack.c.bf16 %v427, %v426
    %v433 = vpack.c.bf16 %v429, %v428
    %v434 = vld [vmem:[#allocation2 + $0x88] sm:$0xf]
    %v435 = vld [vmem:[#allocation2 + $0x8c] sm:$0xf]
    %v436 = vld [vmem:[#allocation2 + $0x90] sm:$0xf]
    %v437 = vld [vmem:[#allocation2 + $0x94] sm:$0xf]
    %v438 = vld [vmem:[#allocation2 + $0x98] sm:$0xf]
    %v439 = vld [vmem:[#allocation2 + $0x9c] sm:$0xf]
    %v440 = vld [vmem:[#allocation2 + $0xa0] sm:$0xf]
    %v441 = vld [vmem:[#allocation2 + $0xa4] sm:$0xf]
    %v442 = vld [vmem:[#allocation2 + $0xa8] sm:$0xf]
    %v443 = vld [vmem:[#allocation2 + $0xac] sm:$0xf]
    %v444 = vld [vmem:[#allocation2 + $0xb0] sm:$0xf]
    %v445 = vld [vmem:[#allocation2 + $0xb4] sm:$0xf]
    %v446 = vld [vmem:[#allocation2 + $0xb8] sm:$0xf]
    %v447 = vld [vmem:[#allocation2 + $0xbc] sm:$0xf]
    %v448 = vld [vmem:[#allocation2 + $0xc0] sm:$0xf]
    %v449 = vld [vmem:[#allocation2 + $0xc4] sm:$0xf]
    %v450 = vlaneseq
    %v451 = vshrl.u32 %v450, 7
    %v452 = vsub.s32 3, %v451
    %v453 = vrot.slane %v304, %v452
    %v470 = vunpack.c.l.b16 %v434
    %v471 = vunpack.c.l.b16 %v435
    %v472 = vunpack.c.l.b16 %v436
    %v473 = vunpack.c.l.b16 %v437
    %v474 = vunpack.c.l.b16 %v438
    %v475 = vunpack.c.l.b16 %v439
    %v476 = vunpack.c.l.b16 %v440
    %v477 = vunpack.c.l.b16 %v441
    %v478 = vunpack.c.l.b16 %v442
    %v479 = vunpack.c.l.b16 %v443
    %v480 = vunpack.c.l.b16 %v444
    %v481 = vunpack.c.l.b16 %v445
    %v482 = vunpack.c.l.b16 %v446
    %v483 = vunpack.c.l.b16 %v447
    %v484 = vunpack.c.l.b16 %v448
    %v485 = vunpack.c.l.b16 %v449
    %v486 = vpack.c.b16 %v471, %v470
    %v487 = vpack.c.b16 %v473, %v472
    %v488 = vpack.c.b16 %v475, %v474
    %v489 = vpack.c.b16 %v477, %v476
    %v490 = vpack.c.b16 %v479, %v478
    %v491 = vpack.c.b16 %v481, %v480
    %v492 = vpack.c.b16 %v483, %v482
    %v493 = vpack.c.b16 %v485, %v484
    %502 = vmatprep.subr.bf16.mxu0 0
    %503 = vmatpush1.bf16.msra.mxu0 %v486
    %504 = vmatprep.subr.bf16.mxu0 0
    %505 = vmatpush1.bf16.msra.mxu0 %v487
    %506 = vmatprep.subr.bf16.mxu0 0
    %507 = vmatpush1.bf16.msra.mxu0 %v488
    %508 = vmatprep.subr.bf16.mxu0 0
    %509 = vmatpush1.bf16.msra.mxu0 %v489
    %510 = vmatprep.subr.bf16.mxu0 0
    %511 = vmatpush1.bf16.msra.mxu0 %v490
    %512 = vmatprep.subr.bf16.mxu0 0
    %513 = vmatpush1.bf16.msra.mxu0 %v491
    %514 = vmatprep.subr.bf16.mxu0 0
    %515 = vmatpush1.bf16.msra.mxu0 %v492
    %516 = vmatprep.subr.bf16.mxu0 0
    %517 = vmatpush1.bf16.msra.mxu0 %v493
    %518 = vmatprep.subr.bf16.mxu0 0
    %519 = vmatpush1.bf16.msra.mxu0 0
    %520 = vmatprep.subr.bf16.mxu0 0
    %521 = vmatpush1.bf16.msra.mxu0 0
    %522 = vmatprep.subr.bf16.mxu0 0
    %523 = vmatpush1.bf16.msra.mxu0 0
    %524 = vmatprep.subr.bf16.mxu0 0
    %525 = vmatpush1.bf16.msra.mxu0 0
    %526 = vmatprep.subr.bf16.mxu0 0
    %527 = vmatpush1.bf16.msra.mxu0 0
    %528 = vmatprep.subr.bf16.mxu0 0
    %529 = vmatpush1.bf16.msra.mxu0 0
    %530 = vmatprep.subr.bf16.mxu0 0
    %531 = vmatpush1.bf16.msra.mxu0 0
    %532 = vmatprep.subr.bf16.mxu0 0
    %533 = vmatpush1.bf16.msra.mxu0 0
    %534 = vmatprep.mubr.bf16.mxu0 0
    %535 = vmatmul.mubr.bf16.gmra.mrb[0].mxu0 %v430
    %v536 = vpop.f32.mrb[0].mxu0
    %v537 = vadd.f32 %v453, %v536
    %v538 = vpop.f32.mrb[0].mxu0
    %v539 = vpop.f32.mrb[0].mxu0
    %v540 = vadd.f32 %v453, %v539
    %v541 = vpop.f32.mrb[0].mxu0
    %542 = vmatprep.mubr.bf16.mxu0 0
    %543 = vmatmul.mubr.bf16.gmra.mrb[0].mxu0 %v431
    %v544 = vpop.f32.mrb[0].mxu0
    %v545 = vadd.f32 %v453, %v544
    %v546 = vpop.f32.mrb[0].mxu0
    %v547 = vpop.f32.mrb[0].mxu0
    %v548 = vadd.f32 %v453, %v547
    %v549 = vpop.f32.mrb[0].mxu0
    %550 = vmatprep.mubr.bf16.mxu0 0
    %551 = vmatmul.mubr.bf16.gmra.mrb[0].mxu0 %v432
    %v552 = vpop.f32.mrb[0].mxu0
    %v553 = vadd.f32 %v453, %v552
    %v554 = vpop.f32.mrb[0].mxu0
    %v555 = vpop.f32.mrb[0].mxu0
    %v556 = vadd.f32 %v453, %v555
    %v557 = vpop.f32.mrb[0].mxu0
    %558 = vmatprep.mubr.bf16.mxu0 0
    %559 = vmatmul.mubr.bf16.gmra.mrb[0].mxu0 %v433
    %v560 = vpop.f32.mrb[0].mxu0
    %v561 = vadd.f32 %v453, %v560
    %v562 = vpop.f32.mrb[0].mxu0
    %v563 = vpop.f32.mrb[0].mxu0
    %v564 = vadd.f32 %v453, %v563
    %v565 = vpop.f32.mrb[0].mxu0
    %566 = vdwg.mxu0
    %v567 = vlaneseq
    %v568 = vand.u32 %v567, 127
    %vm569 = vcmp.lt.s32.totalorder %v568, 8
    %v570 = vtanh.pop %v537
    %v571 = vtanh.pop %v540
    %v572 = vtanh.pop %v545
    %v573 = vtanh.pop %v548
    %v574 = vtanh.pop %v553
    %v575 = vtanh.pop %v556
    %v576 = vtanh.pop %v561
    %v577 = vtanh.pop %v564
    %v578 = vsel %vm569, %v570, %v537
    %v579 = vsel %vm569, %v571, %v540
    %v580 = vsel %vm569, %v572, %v545
    %v581 = vsel %vm569, %v573, %v548
    %v582 = vsel %vm569, %v574, %v553
    %v583 = vsel %vm569, %v575, %v556
    %v584 = vsel %vm569, %v576, %v561
    %v585 = vsel %vm569, %v577, %v564
    %586 = vst.msk [vmem:[%s2] sm:$0xff] %vm52, %v578
    %587 = vst.msk [vmem:[%s2 + $0x8] sm:$0xff] %vm52, %v579
    %588 = vst.msk [vmem:[%s2 + $0x10] sm:$0xff] %vm52, %v580
    %589 = vst.msk [vmem:[%s2 + $0x18] sm:$0xff] %vm52, %v581
    %590 = vst.msk [vmem:[%s2 + $0x20] sm:$0xff] %vm52, %v582
    %591 = vst.msk [vmem:[%s2 + $0x28] sm:$0xff] %vm52, %v583
    %592 = vst.msk [vmem:[%s2 + $0x30] sm:$0xff] %vm52, %v584
    %593 = vst.msk [vmem:[%s2 + $0x38] sm:$0xff] %vm52, %v585
    // Predicated region
    $region14: #{tpu_custom_call.1} parent=1 // pred_check
      _
    $region15: #{tpu_custom_call.1} parent=1 // pred_check_branch
      %595 = sbr.rel (0) target = $region17
    $region16: #{tpu_custom_call.1} parent=1 // pred_region
      _
    $region17: #{tpu_custom_call.1} parent=1 // pred_fallthru
      _
    // Predicated region
    $region18: #{tpu_custom_call.1} parent=1 // pred_check
      _
    $region19: #{tpu_custom_call.1} parent=1 // pred_check_branch
      %597 = sbr.rel (0) target = $region21
    $region20: #{tpu_custom_call.1} parent=1 // pred_region
      _
    $region21: #{tpu_custom_call.1} parent=1 // pred_fallthru
      _
    %598 = vsyncpa [#allocation3], 1

</llo_original>
